<compile_context>
chip_gen: v7x
topology: tpu7x:2x2x1
jax: 0.10.0
libtpu: 0.0.40
codegen_flags: <defaults>
</compile_context>

<pallas_src>
import math

import jax
import jax.numpy as jnp
from jax import lax
from jax.experimental import pallas as pl
from jax.experimental.pallas import tpu as pltpu


def _default_vmem_limit():
    """Generation-aware VMEM budget: ~80% of physical (conservative fallback)."""
    cap = 0
    try:
        info = pltpu.get_tpu_info()
        cap = int(getattr(info, "vmem_capacity_bytes", 0) or 0)
    except Exception:
        cap = 0
    if cap <= 0:
        cap = 64 * 1024 * 1024          # v7x physical VMEM -> safe everywhere
    return min(int(cap * 0.8), 112 * 1024 * 1024)


_VMEM_LIMIT = _default_vmem_limit()


def _pick_tile(dim, pref, align):
    """Largest tile <= pref that divides `dim` and is `align`-aligned, else full dim."""
    if dim <= pref:
        return dim
    t = (pref // align) * align
    while t >= align:
        if dim % t == 0:
            return t
        t -= align
    # TODO(synk): pad-and-mask instead of falling back to the full untiled dim.
    return dim


# ----------------------------------------------------------------------------
# Linear kernel: out = x @ w + b, tiled over (M, N, K), bf16 MXU, fp32 accumulator
# ----------------------------------------------------------------------------
def _linear_kernel(x_ref, w_ref, b_ref, o_ref, acc_ref):
    k = pl.program_id(2)

    @pl.when(k == 0)
    def _():
        acc_ref[...] = jnp.zeros(acc_ref.shape, acc_ref.dtype)

    acc_ref[...] += jnp.dot(x_ref[...].astype(jnp.bfloat16),
                            w_ref[...].astype(jnp.bfloat16),
                            preferred_element_type=jnp.float32)

    @pl.when(k == pl.num_programs(2) - 1)
    def _():
        o_ref[...] = (acc_ref[...] + b_ref[...].astype(jnp.float32)).astype(o_ref.dtype)


def pallas_linear(x2d, w_t, bias, *, tm_pref=256, tn_pref=1024, tk_pref=1024):
    """x2d: [M, d_in] (f32); w_t: [d_in, d_out] (bf16, pre-transposed); bias: [d_out]."""
    m, d_in = x2d.shape
    d_out = w_t.shape[1]
    tm = _pick_tile(m, tm_pref, 8)
    tn = _pick_tile(d_out, tn_pref, 128)
    tk = _pick_tile(d_in, tk_pref, 128)
    b2d = bias.reshape(1, d_out)

    return pl.pallas_call(
        _linear_kernel,
        out_shape=jax.ShapeDtypeStruct((m, d_out), x2d.dtype),
        grid=(m // tm, d_out // tn, d_in // tk),
        in_specs=[
            pl.BlockSpec((tm, tk), lambda i, j, k: (i, k)),
            pl.BlockSpec((tk, tn), lambda i, j, k: (k, j)),
            pl.BlockSpec((1, tn), lambda i, j, k: (0, j)),
        ],
        out_specs=pl.BlockSpec((tm, tn), lambda i, j, k: (i, j)),
        scratch_shapes=[pltpu.VMEM((tm, tn), jnp.float32)],
        compiler_params=pltpu.CompilerParams(
            dimension_semantics=("parallel", "parallel", "arbitrary"),
            vmem_limit_bytes=_VMEM_LIMIT),
    )(x2d, w_t, b2d)


# ----------------------------------------------------------------------------
# Attention kernel A: returns softmax weights (module semantics)
#   grid (B, H, Sq tiles); per-head blocks [tq,depth] / [Sk,depth]; fully parallel.
# ----------------------------------------------------------------------------
def _make_attn_weights_kernel(scale, has_bias):
    def body(q_ref, k_ref, v_ref, bias_ref, o_ref, a_ref):
        q = (q_ref[0, 0] * scale).astype(jnp.bfloat16)         # [tq, depth]
        kk = k_ref[0, 0].astype(jnp.bfloat16)                  # [Sk, depth]
        vv = v_ref[0, 0].astype(jnp.bfloat16)                  # [Sk, depth]
        s = lax.dot_general(q, kk, (((1,), (1,)), ((), ())),
                            preferred_element_type=jnp.float32)  # [tq, Sk]
        if has_bias:
            s = s + bias_ref[0]
        m = jnp.max(s, axis=-1, keepdims=True)
        e = jnp.exp(s - m)
        p = e * pl.reciprocal(jnp.sum(e, axis=-1, keepdims=True), approx=False)
        a_ref[0, 0] = p.astype(a_ref.dtype)
        o_ref[0, 0] = jnp.dot(p.astype(jnp.bfloat16), vv,
                              preferred_element_type=jnp.float32).astype(o_ref.dtype)

    if has_bias:
        def kernel(q_ref, k_ref, v_ref, bias_ref, o_ref, a_ref):
            body(q_ref, k_ref, v_ref, bias_ref, o_ref, a_ref)
    else:
        def kernel(q_ref, k_ref, v_ref, o_ref, a_ref):
            body(q_ref, k_ref, v_ref, None, o_ref, a_ref)
    return kernel


def pallas_mha_with_weights(q_h, k_h, v_h, bias, num_heads):
    """q_h: [B,H,Sq,depth]; k_h,v_h: [B,H,Sk,depth]; bias: [Bb,Sq,Sk] or None.

    Returns (out [B,H,Sq,depth], attn [B,H,Sq,Sk])."""
    b, nh, sq, depth = q_h.shape
    sk = k_h.shape[2]
    scale = 1.0 / math.sqrt(depth)
    tq = _pick_tile(sq, 256, 8)

    in_specs = [
        pl.BlockSpec((1, 1, tq, depth), lambda bi, hi, qi: (bi, hi, qi, 0)),
        pl.BlockSpec((1, 1, sk, depth), lambda bi, hi, qi: (bi, hi, 0, 0)),
        pl.BlockSpec((1, 1, sk, depth), lambda bi, hi, qi: (bi, hi, 0, 0)),
    ]
    args = [q_h, k_h, v_h]
    if bias is not None:
        bias_batched = bias.shape[0] != 1
        in_specs.append(pl.BlockSpec(
            (1, tq, sk),
            (lambda bi, hi, qi: (bi, qi, 0)) if bias_batched
            else (lambda bi, hi, qi: (0, qi, 0))))
        args.append(bias)

    kernel = _make_attn_weights_kernel(scale, bias is not None)
    return pl.pallas_call(
        kernel,
        out_shape=(jax.ShapeDtypeStruct((b, nh, sq, depth), q_h.dtype),
                   jax.ShapeDtypeStruct((b, nh, sq, sk), jnp.float32)),
        grid=(b, nh, sq // tq),
        in_specs=in_specs,
        out_specs=(
            pl.BlockSpec((1, 1, tq, depth), lambda bi, hi, qi: (bi, hi, qi, 0)),
            pl.BlockSpec((1, 1, tq, sk), lambda bi, hi, qi: (bi, hi, qi, 0)),
        ),
        compiler_params=pltpu.CompilerParams(
            dimension_semantics=("parallel", "parallel", "parallel"),
            vmem_limit_bytes=_VMEM_LIMIT),
    )(*args)


# ----------------------------------------------------------------------------
# Attention kernel B: flash-style (no weights output), online softmax over Sk.
#   [B,S,D] layout, head split folded in; lane-dense accumulator update & store.
# ----------------------------------------------------------------------------
def _make_flash_kernel(num_heads, depth, scale, has_bias):
    def body(q_ref, k_ref, v_ref, bias_ref, o_ref, m_ref, l_ref, acc_ref):
        ki = pl.program_id(2)

        @pl.when(ki == 0)
        def _():
            m_ref[...] = jnp.full(m_ref.shape, -jnp.inf, m_ref.dtype)
            l_ref[...] = jnp.zeros(l_ref.shape, l_ref.dtype)
            acc_ref[...] = jnp.zeros(acc_ref.shape, acc_ref.dtype)

        q_all = (q_ref[0] * scale).astype(jnp.bfloat16)        # [tq, D]
        k_all = k_ref[0].astype(jnp.bfloat16)                  # [tk, D]
        v_all = v_ref[0].astype(jnp.bfloat16)                  # [tk, D]
        bias = bias_ref[0] if has_bias else None               # [tq, tk] fp32

        m_prev = m_ref[...]                                    # [tq, H]
        l_prev = l_ref[...]

        alpha_cols, pv_blocks = [], []
        for h in range(num_heads):
            lo, hi = h * depth, (h + 1) * depth
            s = lax.dot_general(q_all[:, lo:hi], k_all[:, lo:hi],
                                (((1,), (1,)), ((), ())),
                                preferred_element_type=jnp.float32)   # [tq, tk]
            if bias is not None:
                s = s + bias
            m_p = m_prev[:, h:h + 1]                           # [tq, 1]
            m_new = jnp.maximum(m_p, jnp.max(s, axis=-1, keepdims=True))
            alpha = jnp.exp(m_p - m_new)
            p = jnp.exp(s - m_new)
            l_ref[:, h:h + 1] = alpha * l_prev[:, h:h + 1] + jnp.sum(
                p, axis=-1, keepdims=True)
            m_ref[:, h:h + 1] = m_new
            alpha_cols.append(alpha)
            pv_blocks.append(jnp.dot(p.astype(jnp.bfloat16), v_all[:, lo:hi],
                                     preferred_element_type=jnp.float32))

        # Full-lane-width rescale + add (single pass over the accumulator).
        alpha_full = jnp.concatenate(
            [jnp.broadcast_to(a, (a.shape[0], depth)) for a in alpha_cols], axis=-1)
        pv_full = jnp.concatenate(pv_blocks, axis=-1)          # [tq, D]
        acc_ref[...] = alpha_full * acc_ref[...] + pv_full

        @pl.when(ki == pl.num_programs(2) - 1)
        def _():
            inv = pl.reciprocal(l_ref[...], approx=False)      # [tq, H]
            inv_full = jnp.concatenate(
                [jnp.broadcast_to(inv[:, h:h + 1], (inv.shape[0], depth))
                 for h in range(num_heads)], axis=-1)
            o_ref[0] = (acc_ref[...] * inv_full).astype(o_ref.dtype)   # lane-dense store

    if has_bias:
        def kernel(q_ref, k_ref, v_ref, bias_ref, o_ref, m_ref, l_ref, acc_ref):
            body(q_ref, k_ref, v_ref, bias_ref, o_ref, m_ref, l_ref, acc_ref)
    else:
        def kernel(q_ref, k_ref, v_ref, o_ref, m_ref, l_ref, acc_ref):
            body(q_ref, k_ref, v_ref, None, o_ref, m_ref, l_ref, acc_ref)
    return kernel


def pallas_mha_flash(q, k, v, bias, num_heads, *, d_model=None,
                     q_blk=0, k_blk=0, v_blk=0):
    """Flash attention, no weights output.

    q/k/v: [B,S,n*d] with the wanted projection in last-dim block q_blk/k_blk/v_blk
    (n=1 for plain [B,S,D]; n=3 with blk 0/1/2 for a fused QKV array — avoids the
    HBM slice copies).  bias: [Bb,Sq,Sk] or None.  Returns [B,Sq,D]."""
    b, sq, _ = q.shape
    sk = k.shape[1]
    d = d_model if d_model is not None else q.shape[-1]
    depth = d // num_heads
    scale = 1.0 / math.sqrt(depth)
    tq = _pick_tile(sq, 256, 8)
    # Cap Sk tile so a double-buffered K (or V) block stays ~<= 8 MiB.
    tk_pref = min(1024, max(128, (8 * 1024 * 1024) // (4 * d)))
    tk = _pick_tile(sk, tk_pref, 128)

    in_specs = [
        pl.BlockSpec((1, tq, d), lambda bi, qi, ki: (bi, qi, q_blk)),
        pl.BlockSpec((1, tk, d), lambda bi, qi, ki: (bi, ki, k_blk)),
        pl.BlockSpec((1, tk, d), lambda bi, qi, ki: (bi, ki, v_blk)),
    ]
    args = [q, k, v]
    if bias is not None:
        bias_batched = bias.shape[0] != 1
        in_specs.append(pl.BlockSpec(
            (1, tq, tk),
            (lambda bi, qi, ki: (bi, qi, ki)) if bias_batched
            else (lambda bi, qi, ki: (0, qi, ki))))
        args.append(bias)

    kernel = _make_flash_kernel(num_heads, depth, scale, bias is not None)
    return pl.pallas_call(
        kernel,
        out_shape=jax.ShapeDtypeStruct((b, sq, d), q.dtype),
        grid=(b, sq // tq, sk // tk),
        in_specs=in_specs,
        out_specs=pl.BlockSpec((1, tq, d), lambda bi, qi, ki: (bi, qi, 0)),
        scratch_shapes=[
            pltpu.VMEM((tq, num_heads), jnp.float32),   # running max per head
            pltpu.VMEM((tq, num_heads), jnp.float32),   # running denom per head
            pltpu.VMEM((tq, d), jnp.float32),           # output accumulator
        ],
        compiler_params=pltpu.CompilerParams(
            dimension_semantics=("parallel", "parallel", "arbitrary"),
            vmem_limit_bytes=_VMEM_LIMIT),
    )(*args)


# ----------------------------------------------------------------------------
# Mask folding: one additive bias [Bb, Sq, Sk] (Bb in {1, B}); None when unused.
# ----------------------------------------------------------------------------
def _build_bias(mask, attention_mask, sq, sk):
    if mask is None and attention_mask is None:
        return None
    bias = jnp.zeros((1, sq, sk), jnp.float32)
    if mask is not None:
        bias = bias + mask[sk - sq:sk, :sk].astype(jnp.float32)[None] * (-10000.0)
    if attention_mask is not None:
        am = jnp.asarray(attention_mask, jnp.float32)
        if am.ndim == 4:
            if am.shape[1] != 1:
                # TODO(synk): per-head attention_mask ([B,H,Sq,Sk]) is not plumbed
                #             through the fused kernels.
                raise NotImplementedError("per-head attention_mask is not supported")
            am = am[:, 0]
        while am.ndim < 3:
            am = am[None]
        am = jnp.broadcast_to(am, (am.shape[0], sq, sk))
        bias = bias + am           # broadcasts over the batch dim
    return bias


# ----------------------------------------------------------------------------
# Module wrapper
# ----------------------------------------------------------------------------
class MultiHeadAttentionPallas:
    def __init__(self, d_model_size, num_heads, key):
        self.num_heads = num_heads
        self.d_model_size = d_model_size
        self.depth = d_model_size // num_heads

        keys = jax.random.split(key, 8)

        def xavier_uniform(k, shape, gain=1.0):
            fan_in, fan_out = shape[1], shape[0]
            limit = gain * math.sqrt(6.0 / (fan_in + fan_out))
            return jax.random.uniform(k, shape, jnp.float32, minval=-limit, maxval=limit)

        def bias_init(k, fan_in, size):
            bound = 1.0 / math.sqrt(fan_in)
            return jax.random.uniform(k, (size,), jnp.float32, minval=-bound, maxval=bound)

        g = 1.0 / math.sqrt(2.0)
        d = d_model_size
        self.Wq_w = xavier_uniform(keys[0], (d, d), gain=g)
        self.Wk_w = xavier_uniform(keys[1], (d, d), gain=g)
        self.Wv_w = xavier_uniform(keys[2], (d, d), gain=1.0 if False else 1.0)
        self.Wv_w = xavier_uniform(keys[2], (d, d), gain=g)
        self.dense_w = xavier_uniform(keys[3], (d, d), gain=1.0)
        self.Wq_b = bias_init(keys[4], d, d)
        self.Wk_b = bias_init(keys[5], d, d)
        self.Wv_b = bias_init(keys[6], d, d)
        self.dense_b = bias_init(keys[7], d, d)

        # Pre-transposed bf16 weights for the Pallas matmul kernel (x @ W^T layout),
        # plus a fused [d, 3d] QKV weight for the self-attention fast path.
        self.Wq_t = self.Wq_w.T.astype(jnp.bfloat16)
        self.Wk_t = self.Wk_w.T.astype(jnp.bfloat16)
        self.Wv_t = self.Wv_w.T.astype(jnp.bfloat16)
        self.dense_t = self.dense_w.T.astype(jnp.bfloat16)
        self.W_qkv_t = jnp.concatenate(
            [self.Wq_w.T, self.Wk_w.T, self.Wv_w.T], axis=1).astype(jnp.bfloat16)
        self.b_qkv = jnp.concatenate([self.Wq_b, self.Wk_b, self.Wv_b])

    def __call__(self, v, k, q, mask=None, attention_mask=None,
                 return_attention_weights=True):
        batch_size, sq, d = q.shape
        sk = k.shape[1]
        nh, depth = self.num_heads, self.depth

        self_attn = (q is k) and (k is v)
        if self_attn:
            # Fused QKV projection: single pass over x, lane-dense 3*d output.
            qkv = pallas_linear(q.reshape(-1, d), self.W_qkv_t, self.b_qkv)
            qkv = qkv.reshape(batch_size, sq, 3 * d)
            q_p = k_p = v_p = None
        else:
            q_p = pallas_linear(q.reshape(-1, d), self.Wq_t, self.Wq_b
                                ).reshape(batch_size, sq, d)
            k_p = pallas_linear(k.reshape(-1, d), self.Wk_t, self.Wk_b
                                ).reshape(batch_size, sk, d)
            v_p = pallas_linear(v.reshape(-1, d), self.Wv_t, self.Wv_b
                                ).reshape(batch_size, sk, d)

        bias = _build_bias(mask, attention_mask, sq, sk)

        if return_attention_weights:
            if self_attn:
                q_p = qkv[..., :d]
                k_p = qkv[..., d:2 * d]
                v_p = qkv[..., 2 * d:]
            split = lambda x, s: jnp.transpose(
                x.reshape(batch_size, s, nh, depth), (0, 2, 1, 3))
            out_h, attn_weights = pallas_mha_with_weights(
                split(q_p, sq), split(k_p, sk), split(v_p, sk), bias, nh)
            attn_out = jnp.transpose(out_h, (0, 2, 1, 3)).reshape(batch_size, sq, d)
        else:
            if self_attn and d % 128 == 0:
                # Zero-copy q/k/v selection out of the fused QKV via BlockSpec
                # last-dim block indices (no HBM slice materialization).
                attn_out = pallas_mha_flash(qkv, qkv, qkv, bias, nh,
                                            d_model=d, q_blk=0, k_blk=1, v_blk=2)
            else:
                if self_attn:
                    q_p = qkv[..., :d]
                    k_p = qkv[..., d:2 * d]
                    v_p = qkv[..., 2 * d:]
                attn_out = pallas_mha_flash(q_p, k_p, v_p, bias, nh, d_model=d)
            attn_weights = None

        out = pallas_linear(attn_out.reshape(-1, d), self.dense_t, self.dense_b
                            ).reshape(batch_size, sq, d)
        return out, attn_weights


# ----------------------------------------------------------------------------
# Pure-JAX (fp32) reference matching the PyTorch module
# ----------------------------------------------------------------------------
def _reference_forward(mha, v, k, q, mask=None, attention_mask=None):
    b, sq, d = q.shape
    sk = k.shape[1]
    qp = q @ mha.Wq_w.T + mha.Wq_b
    kp = k @ mha.Wk_w.T + mha.Wk_b
    vp = v @ mha.Wv_w.T + mha.Wv_b
    split = lambda x, s: jnp.transpose(
        x.reshape(b, s, mha.num_heads, mha.depth), (0, 2, 1, 3))
    qh, kh, vh = split(qp, sq), split(kp, sk), split(vp, sk)
    logits = jnp.einsum("bhqd,bhkd->bhqk", qh, kh) / jnp.sqrt(jnp.float32(mha.depth))
    if mask is not None:
        logits = logits + mask[sk - sq: sk, :sk].astype(jnp.float32) * (-10000.0)
    if attention_mask is not None:
        logits = logits + jnp.asarray(attention_mask, jnp.float32)
    p = jax.nn.softmax(logits, axis=-1)
    o = jnp.einsum("bhqk,bhkd->bhqd", p, vh)
    o = jnp.transpose(o, (0, 2, 1, 3)).reshape(b, sq, d)
    return o @ mha.dense_w.T + mha.dense_b, p


if __name__ == "__main__":
    key = jax.random.PRNGKey(0)
    k_params, k_x, k_q, k_k, k_v = jax.random.split(key, 5)

    batch, seq, seq_kv, d_model, num_heads = 2, 8, 16, 32, 4
    mha = MultiHeadAttentionPallas(d_model, num_heads, k_params)

    # --- Test 1: self-attention (fused QKV) with causal mask + [B,1,1,Sk] pad mask ---
    x = jax.random.normal(k_x, (batch, seq, d_model), jnp.float32)
    causal_mask = jnp.triu(jnp.ones((seq, seq), jnp.float32), k=1)
    key_pos = jnp.arange(seq)[None, None, None, :]
    valid_len = jnp.array([seq - 1, seq - 2])[:, None, None, None]
    pad_mask = jnp.where(key_pos >= valid_len, -10000.0, 0.0).astype(jnp.float32)

    out1, attn1 = mha(x, x, x, mask=causal_mask, attention_mask=pad_mask)
    out1 = jax.block_until_ready(out1)
    attn1 = jax.block_until_ready(attn1)
    ref_out1, ref_attn1 = _reference_forward(mha, x, x, x, causal_mask, pad_mask)
    assert out1.shape == (batch, seq, d_model)
    assert attn1.shape == (batch, num_heads, seq, seq)
    # bf16 MXU operands vs fp32 reference -> relaxed tolerances
    assert jnp.allclose(out1, ref_out1, atol=5e-2, rtol=5e-2)
    assert jnp.allclose(attn1, ref_attn1, atol=2e-2, rtol=2e-2)

    # --- Test 2: cross-attention (separate projections), different kv length ---
    q_in = jax.random.normal(k_q, (batch, seq, d_model), jnp.float32)
    k_in = jax.random.normal(k_k, (batch, seq_kv, d_model), jnp.float32)
    v_in = jax.random.normal(k_v, (batch, seq_kv, d_model), jnp.float32)
    out2, attn2 = mha(v_in, k_in, q_in)
    out2 = jax.block_until_ready(out2)
    attn2 = jax.block_until_ready(attn2)
    ref_out2, ref_attn2 = _reference_forward(mha, v_in, k_in, q_in)
    assert out2.shape == (batch, seq, d_model)
    assert attn2.shape == (batch, num_heads, seq, seq_kv)
    assert jnp.allclose(out2, ref_out2, atol=5e-2, rtol=5e-2)
    assert jnp.allclose(attn2, ref_attn2, atol=2e-2, rtol=2e-2)

    # --- Test 3: flash fast path (no weights output) ---
    out3, none_attn = mha(x, x, x, mask=causal_mask, attention_mask=pad_mask,
                          return_attention_weights=False)
    out3 = jax.block_until_ready(out3)
    assert none_attn is None
    assert jnp.allclose(out3, ref_out1, atol=5e-2, rtol=5e-2)
    assert jnp.allclose(out3, out1, atol=2e-2, rtol=2e-2)

    print("KERNEL_OK")
</pallas_src>

<mosaic_0001>
module attributes {stable_mosaic.version = 11 : i64} {
  func.func @_linear_kernel(%arg0: i32, %arg1: i32, %arg2: i32, %arg3: memref<16x32xf32, #tpu.memory_space<vmem>>, %arg4: memref<32x96xbf16, #tpu.memory_space<vmem>>, %arg5: memref<1x96xf32, #tpu.memory_space<vmem>>, %arg6: memref<16x96xf32, #tpu.memory_space<vmem>>, %arg7: memref<16x96xf32, #tpu.memory_space<vmem>>) attributes {dimension_semantics = [#tpu.dimension_semantics<parallel>, #tpu.dimension_semantics<parallel>, #tpu.dimension_semantics<arbitrary>], iteration_bounds = array<i64: 1, 1, 1>, scalar_prefetch = 0 : i64, scratch_operands = 1 : i64, tpu.core_type = #tpu.core_type<tc>, window_params = [{transform_indices = @transform_0, window_bounds = array<i64: 16, 32>}, {transform_indices = @transform_1, window_bounds = array<i64: 32, 96>}, {transform_indices = @transform_2, window_bounds = array<i64: 1, 96>}, {transform_indices = @transform_3, window_bounds = array<i64: 16, 96>}]} {
    %c0_i32 = arith.constant 0 : i32
    %0 = arith.cmpi eq, %arg2, %c0_i32 : i32
    %1 = arith.extui %0 : i1 to i32
    %c0_i32_0 = arith.constant 0 : i32
    %2 = arith.cmpi ne, %1, %c0_i32_0 : i32
    scf.if %2 {
      %cst_10 = arith.constant 0.000000e+00 : f32
      %13 = vector.broadcast %cst_10 : f32 to vector<16x96xf32>
      %c0_11 = arith.constant 0 : index
      %c0_12 = arith.constant 0 : index
      %14 = vector.load %arg7[%c0_11, %c0_12] : memref<16x96xf32, #tpu.memory_space<vmem>>, vector<16x96xf32>
      tpu.vector_store %arg7[%c0_11, %c0_12], %13 {strides = array<i32>} : memref<16x96xf32, #tpu.memory_space<vmem>>, vector<16x96xf32>,
    } else {
    }
    %c0 = arith.constant 0 : index
    %c0_1 = arith.constant 0 : index
    %3 = vector.load %arg7[%c0, %c0_1] : memref<16x96xf32, #tpu.memory_space<vmem>>, vector<16x96xf32>
    %c0_2 = arith.constant 0 : index
    %c0_3 = arith.constant 0 : index
    %4 = vector.load %arg3[%c0_2, %c0_3] : memref<16x32xf32, #tpu.memory_space<vmem>>, vector<16x32xf32>
    %5 = arith.truncf %4 : vector<16x32xf32> to vector<16x32xbf16>
    %c0_4 = arith.constant 0 : index
    %c0_5 = arith.constant 0 : index
    %6 = vector.load %arg4[%c0_4, %c0_5] : memref<32x96xbf16, #tpu.memory_space<vmem>>, vector<32x96xbf16>
    %cst = arith.constant dense<0.000000e+00> : vector<16x96xf32>
    %7 = tpu.matmul %5, %6, %cst {dimension_numbers = #tpu.dot_dimension_numbers<[1], [0], [0], [1], [0, 0, 1, 1], [], []>} : vector<16x32xbf16>, vector<32x96xbf16>, vector<16x96xf32> -> vector<16x96xf32>
    %8 = arith.addf %3, %7 : vector<16x96xf32>
    %c0_6 = arith.constant 0 : index
    %c0_7 = arith.constant 0 : index
    %9 = vector.load %arg7[%c0_6, %c0_7] : memref<16x96xf32, #tpu.memory_space<vmem>>, vector<16x96xf32>
    tpu.vector_store %arg7[%c0_6, %c0_7], %8 {strides = array<i32>} : memref<16x96xf32, #tpu.memory_space<vmem>>, vector<16x96xf32>,
    %c0_i32_8 = arith.constant 0 : i32
    %10 = arith.cmpi eq, %arg2, %c0_i32_8 : i32
    %11 = arith.extui %10 : i1 to i32
    %c0_i32_9 = arith.constant 0 : i32
    %12 = arith.cmpi ne, %11, %c0_i32_9 : i32
    scf.if %12 {
      %c0_10 = arith.constant 0 : index
      %c0_11 = arith.constant 0 : index
      %13 = vector.load %arg7[%c0_10, %c0_11] : memref<16x96xf32, #tpu.memory_space<vmem>>, vector<16x96xf32>
      %c0_12 = arith.constant 0 : index
      %c0_13 = arith.constant 0 : index
      %14 = vector.load %arg5[%c0_12, %c0_13] : memref<1x96xf32, #tpu.memory_space<vmem>>, vector<1x96xf32>
      %15 = vector.broadcast %14 : vector<1x96xf32> to vector<16x96xf32>
      %16 = arith.addf %13, %15 : vector<16x96xf32>
      %c0_14 = arith.constant 0 : index
      %c0_15 = arith.constant 0 : index
      %17 = vector.load %arg6[%c0_14, %c0_15] : memref<16x96xf32, #tpu.memory_space<vmem>>, vector<16x96xf32>
      tpu.vector_store %arg6[%c0_14, %c0_15], %16 {strides = array<i32>} : memref<16x96xf32, #tpu.memory_space<vmem>>, vector<16x96xf32>,
    } else {
    }
    return
  }
  func.func @transform_0(%arg0: i32, %arg1: i32, %arg2: i32) -> (i32, i32) {
    %c0_i32 = arith.constant 0 : i32
    return %arg0, %arg2 : i32, i32
  }
  func.func @transform_1(%arg0: i32, %arg1: i32, %arg2: i32) -> (i32, i32) {
    %c0_i32 = arith.constant 0 : i32
    return %arg2, %arg1 : i32, i32
  }
  func.func @transform_2(%arg0: i32, %arg1: i32, %arg2: i32) -> (i32, i32) {
    %c0_i32 = arith.constant 0 : i32
    %c0_i32_0 = arith.constant 0 : i32
    return %c0_i32, %arg1 : i32, i32
  }
  func.func @transform_3(%arg0: i32, %arg1: i32, %arg2: i32) -> (i32, i32) {
    %c0_i32 = arith.constant 0 : i32
    return %arg0, %arg1 : i32, i32
  }
}

</mosaic_0001>

<llo_original>
// kernel: tpu_custom_call.1
$region0: #{tpu_custom_call.1}
  #allocation0 [shape = 'u32[]', space=smem, size = 0x4, offset = 0x4, fixed_abs, tag = 'smem constant byte address 0x4 - core index']
  #allocation1 [shape = 'u32[144,128]{1,0:T(1,128)}', space=vmem, size = 0x12000, scoped, tag = 'internal scratch']
  #allocation2 [shape = 'f32[16,96]{1,0:T(8,128)}', space=vmem, size = 0x2000, scoped, tag = 'scratch operand']
  %s0 = inlined_call_operand.hbm [shape: f32[16,32], index: 0, kind: input, shape index: {}]
  %s1 = inlined_call_operand.hbm [shape: bf16[32,96], index: 1, kind: input, shape index: {}]
  %s2 = inlined_call_operand.vmem [shape: f32[1,96], index: 2, kind: input, shape index: {}]
  %s3 = inlined_call_operand.hbm [shape: f32[16,96], index: 3, kind: output, shape index: {}]
  %s4 = sld [smem:[#allocation0]]
  $region38: #{tpu_custom_call.1} parent=0
    _
  %s6 = ssub.s32 1, %s4
  %s7 = scalar_select 0, %s6, %s4
  $region1: #{tpu_custom_call.1} parent=0
    #allocation3 [shape = 'u8[8192]{0}', space=vmem, size = 0x2000, scoped, tag = 'input window, operand 0, single buffered']
    #allocation4 [shape = 's32[1]{0}', space=sflag, size = 0x4, scoped, tag = 'scoped memory for tpu_custom_call.1']
    #allocation5 [shape = 's32[1]{0}', space=sflag, size = 0x4, scoped, tag = 'scoped memory for tpu_custom_call.1']
    #allocation6 [shape = 'u8[8192]{0}', space=vmem, size = 0x2000, scoped, tag = 'input window, operand 1, single buffered']
    #allocation7 [shape = 's32[1]{0}', space=sflag, size = 0x4, scoped, tag = 'scoped memory for tpu_custom_call.1']
    #allocation8 [shape = 'u8[8192]{0}', space=vmem, size = 0x2000, scoped, tag = 'output window, operand 0, single buffered']
    %8 = vsyncpa [#allocation4], 0
    %9 = vsyncpa [#allocation7], 0
    %10 = vsyncpa [#allocation5], 0
    // Predicated region
    $region2: #{tpu_custom_call.1} parent=1 // pred_check
      _
    $region3: #{tpu_custom_call.1} parent=1 // pred_check_branch
      %12 = sbr.rel (0) target = $region5
    $region4: #{tpu_custom_call.1} parent=1 // pred_region
      %s14 = ssub.s32 256, 256
      %15 = vsyncadd [#allocation4], %s14
      %s16 = sshll.u32 [#allocation3], 4
      %s17 = int_to_ptr.vmem [resolvable:$true] %s16
      %22 = dma.hbm_to_vmem [thread:$0]  %s0, 256, %s17, [#allocation4], 128, 128, 8
    $region5: #{tpu_custom_call.1} parent=1 // pred_fallthru
      _
    // Predicated region
    $region6: #{tpu_custom_call.1} parent=1 // pred_check
      _
    $region7: #{tpu_custom_call.1} parent=1 // pred_check_branch
      %24 = sbr.rel (0) target = $region9
    $region8: #{tpu_custom_call.1} parent=1 // pred_region
      %s26 = ssub.s32 256, 256
      %27 = vsyncadd [#allocation7], %s26
      %s28 = sshll.u32 [#allocation6], 4
      %s29 = int_to_ptr.vmem [resolvable:$true] %s28
      %34 = dma.hbm_to_vmem [thread:$0]  %s1, 256, %s29, [#allocation7], 64, 64, 4
    $region9: #{tpu_custom_call.1} parent=1 // pred_fallthru
      _
    // Predicated region
    $region10: #{tpu_custom_call.1} parent=1 // pred_check
      _
    $region11: #{tpu_custom_call.1} parent=1 // pred_check_branch
      %36 = sbr.rel (0) target = $region13
    $region12: #{tpu_custom_call.1} parent=1 // pred_region
      _
    $region13: #{tpu_custom_call.1} parent=1 // pred_fallthru
      _
    // Predicated region
    $region14: #{tpu_custom_call.1} parent=1 // pred_check
      _
    $region15: #{tpu_custom_call.1} parent=1 // pred_check_branch
      %38 = sbr.rel (0) target = $region17
    $region16: #{tpu_custom_call.1} parent=1 // pred_region
      %39 = dma.done [#allocation4], 256
    $region17: #{tpu_custom_call.1} parent=1 // pred_fallthru
      _
    // Predicated region
    $region18: #{tpu_custom_call.1} parent=1 // pred_check
      _
    $region19: #{tpu_custom_call.1} parent=1 // pred_check_branch
      %41 = sbr.rel (0) target = $region21
    $region20: #{tpu_custom_call.1} parent=1 // pred_region
      %42 = dma.done [#allocation7], 256
    $region21: #{tpu_custom_call.1} parent=1 // pred_fallthru
      _
    %p44 = scmp.eq.s32.totalorder 0, 0
    // Predicated region
    $region22: #{tpu_custom_call.1} parent=1 // pred_check
      %p45 = pneg %p44
    $region23: #{tpu_custom_call.1} parent=1 // pred_check_branch
      %47 = sbr.rel (%p45) target = $region25
    $region24: #{tpu_custom_call.1} parent=1 // pred_region
      %vm48 = vcmask 785408
      %49 = vst.msk [vmem:[#allocation2] sm:$0xff] %vm48, 0.0
      %50 = vst.msk [vmem:[#allocation2 + $0x8] sm:$0xff] %vm48, 0.0
    $region25: #{tpu_custom_call.1} parent=1 // pred_fallthru
      _
    %v51 = vld [vmem:[#allocation2] sm:$0xff]
    %v52 = vld [vmem:[#allocation2 + $0x8] sm:$0xff]
    %v53 = vld [vmem:[#allocation3] sm:$0xff]
    %v54 = vld [vmem:[#allocation3 + $0x8] sm:$0xff]
    %v55 = vpack.c.bf16 %v54, %v53
    %v56 = vld [vmem:[#allocation6] sm:$0xf]
    %v57 = vld [vmem:[#allocation6 + $0x4] sm:$0xf]
    %v58 = vld [vmem:[#allocation6 + $0x8] sm:$0xf]
    %v59 = vld [vmem:[#allocation6 + $0xc] sm:$0xf]
    %v64 = vunpack.c.l.b16 %v56
    %v65 = vunpack.c.l.b16 %v57
    %v66 = vunpack.c.l.b16 %v58
    %v67 = vunpack.c.l.b16 %v59
    %v68 = vpack.c.b16 %v65, %v64
    %v69 = vpack.c.b16 %v67, %v66
    %vm72 = vcmask 261120
    %v74 = vsel %vm72, %v55, 0
    %76 = vmatprep.subr.bf16.mxu0 0
    %77 = vmatpush1.bf16.msra.mxu0 %v68
    %78 = vmatprep.subr.bf16.mxu0 0
    %79 = vmatpush1.bf16.msra.mxu0 %v69
    %80 = vmatprep.subr.bf16.mxu0 0
    %81 = vmatpush1.bf16.msra.mxu0 0
    %82 = vmatprep.subr.bf16.mxu0 0
    %83 = vmatpush1.bf16.msra.mxu0 0
    %84 = vmatprep.subr.bf16.mxu0 0
    %85 = vmatpush1.bf16.msra.mxu0 0
    %86 = vmatprep.subr.bf16.mxu0 0
    %87 = vmatpush1.bf16.msra.mxu0 0
    %88 = vmatprep.subr.bf16.mxu0 0
    %89 = vmatpush1.bf16.msra.mxu0 0
    %90 = vmatprep.subr.bf16.mxu0 0
    %91 = vmatpush1.bf16.msra.mxu0 0
    %92 = vmatprep.subr.bf16.mxu0 0
    %93 = vmatpush1.bf16.msra.mxu0 0
    %94 = vmatprep.subr.bf16.mxu0 0
    %95 = vmatpush1.bf16.msra.mxu0 0
    %96 = vmatprep.subr.bf16.mxu0 0
    %97 = vmatpush1.bf16.msra.mxu0 0
    %98 = vmatprep.subr.bf16.mxu0 0
    %99 = vmatpush1.bf16.msra.mxu0 0
    %100 = vmatprep.subr.bf16.mxu0 0
    %101 = vmatpush1.bf16.msra.mxu0 0
    %102 = vmatprep.subr.bf16.mxu0 0
    %103 = vmatpush1.bf16.msra.mxu0 0
    %104 = vmatprep.subr.bf16.mxu0 0
    %105 = vmatpush1.bf16.msra.mxu0 0
    %106 = vmatprep.subr.bf16.mxu0 0
    %107 = vmatpush1.bf16.msra.mxu0 0
    %108 = vmatprep.mubr.bf16.mxu0 0
    %109 = vmatmul.mubr.bf16.gmra.mrb[0].mxu0 %v74
    %v110 = vpop.f32.mrb[0].mxu0
    %v111 = vadd.f32 0.0, %v110
    %v112 = vpop.f32.mrb[0].mxu0
    %v113 = vpop.f32.mrb[0].mxu0
    %v114 = vadd.f32 0.0, %v113
    %v115 = vpop.f32.mrb[0].mxu0
    %116 = vdwg.mxu0
    %v117 = vadd.f32 %v51, %v111
    %v118 = vadd.f32 %v52, %v114
    %vm119 = vcmask 785408
    %120 = vst.msk [vmem:[#allocation2] sm:$0xff] %vm119, %v117
    %121 = vst.msk [vmem:[#allocation2 + $0x8] sm:$0xff] %vm119, %v118
    // Predicated region
    $region26: #{tpu_custom_call.1} parent=1 // pred_check
      %p122 = pneg %p44
    $region27: #{tpu_custom_call.1} parent=1 // pred_check_branch
      %124 = sbr.rel (%p122) target = $region29
    $region28: #{tpu_custom_call.1} parent=1 // pred_region
      %v125 = vld [vmem:[#allocation2] sm:$0xff]
      %v126 = vld [vmem:[#allocation2 + $0x8] sm:$0xff]
      %v127 = vld [vmem:[%s2] sm:$0x1]
      %v129 = vlaneseq
      %v130 = vshrl.u32 %v129, 7
      %v131 = vsub.s32 0, %v130
      %v132 = vrot.slane %v127, %v131
      %v134 = vadd.f32 %v125, %v132
      %v135 = vadd.f32 %v126, %v132
      %136 = vst.msk [vmem:[#allocation8] sm:$0xff] %vm119, %v134
      %137 = vst.msk [vmem:[#allocation8 + $0x8] sm:$0xff] %vm119, %v135
    $region29: #{tpu_custom_call.1} parent=1 // pred_fallthru
      _
    // Predicated region
    $region30: #{tpu_custom_call.1} parent=1 // pred_check
      _
    $region31: #{tpu_custom_call.1} parent=1 // pred_check_branch
      %139 = sbr.rel (0) target = $region33
    $region32: #{tpu_custom_call.1} parent=1 // pred_region
      %s141 = ssub.s32 256, 256
      %142 = vsyncadd [#allocation5], %s141
      %s143 = sshll.u32 [#allocation8], 4
      %s144 = int_to_ptr.vmem [resolvable:$true] %s143
      %149 = dma.vmem_to_hbm [thread:$0]  %s144, 256, %s3, [#allocation5], 128, 128, 8
    $region33: #{tpu_custom_call.1} parent=1 // pred_fallthru
      _
    // Predicated region
    $region34: #{tpu_custom_call.1} parent=1 // pred_check
      _
    $region35: #{tpu_custom_call.1} parent=1 // pred_check_branch
      %151 = sbr.rel (0) target = $region37
    $region36: #{tpu_custom_call.1} parent=1 // pred_region
      %152 = dma.done [#allocation5], 256
    $region37: #{tpu_custom_call.1} parent=1 // pred_fallthru
      _
    %153 = vsyncpa [#allocation4], 1
    %154 = vsyncpa [#allocation7], 1
    %155 = vsyncpa [#allocation5], 1

</llo_original>
